<compile_context>
chip_gen: v6e
topology: v6e:2x2x1
jax: 0.10.0
libtpu: 0.0.40
codegen_flags: <defaults>
</compile_context>

<pallas_src>
import jax
import jax.numpy as jnp
from jax.experimental import pallas as pl
from jax.experimental.pallas import tpu as pltpu


def _fourier_kernel(state_ref, w1_ref, b1_ref, w2_ref, b2_ref, out_ref):
    """One grid step = one batch tile through the 2-layer MLP."""
    state = state_ref[...]                                   # (TB, D)
    h = jnp.dot(state, w1_ref[...],
                preferred_element_type=jnp.float32) + b1_ref[...]
    h = jnp.maximum(h, 0.0)                                  # ReLU
    out_ref[...] = (jnp.dot(h, w2_ref[...],
                            preferred_element_type=jnp.float32)
                    + b2_ref[...])                           # (TB, 1)


def fouriercoeffnet_forward(state, params):
    """fouriercoeff(state): (B, D) f32 -> (B, 1) f32."""
    B, D = state.shape
    H = params["w1"].shape[1]

    # Batch tile: one tile for small B, otherwise 512-row tiles (multiple of 8).
    TB = B if B <= 512 else 512
    pad = (-B) % TB
    if pad:
        state = jnp.pad(state, ((0, pad), (0, 0)))
    Bp = B + pad
    grid = (Bp // TB,)

    grid_spec = pltpu.PrefetchScalarGridSpec(
        num_scalar_prefetch=0,
        grid=grid,
        in_specs=[
            pl.BlockSpec((TB, D), lambda i: (i, 0)),   # state tile
            pl.BlockSpec((D, H), lambda i: (0, 0)),    # W1 (resident)
            pl.BlockSpec((1, H), lambda i: (0, 0)),    # b1 (resident)
            pl.BlockSpec((H, 1), lambda i: (0, 0)),    # W2 (resident)
            pl.BlockSpec((1, 1), lambda i: (0, 0)),    # b2 (resident)
        ],
        out_specs=pl.BlockSpec((TB, 1), lambda i: (i, 0)),
    )

    out = pl.pallas_call(
        _fourier_kernel,
        out_shape=jax.ShapeDtypeStruct((Bp, 1), jnp.float32),
        grid_spec=grid_spec,
        compiler_params=pltpu.CompilerParams(
            dimension_semantics=("parallel",)),        # batch axis -> megacore
    )(state, params["w1"], params["b1"], params["w2"], params["b2"])

    return out[:B]


def _xavier_uniform(key, fan_in, fan_out, shape):
    limit = jnp.sqrt(6.0 / (fan_in + fan_out))
    return jax.random.uniform(key, shape, jnp.float32, -limit, limit)


def init_params(key, hidden_dim, hidden_dim_fourier):
    """Xavier-uniform weights (gain=1), zero biases — mirrors weights_init_."""
    D, H = hidden_dim, hidden_dim_fourier
    k1, k2 = jax.random.split(key, 2)
    return {
        "w1": _xavier_uniform(k1, D, H, (D, H)),       # (D, H)
        "b1": jnp.zeros((1, H), jnp.float32),
        "w2": _xavier_uniform(k2, H, 1, (H, 1)),       # (H, 1)
        "b2": jnp.zeros((1, 1), jnp.float32),
    }


def reference_forward(state, params):
    """Pure-JAX reference mirroring the PyTorch module."""
    h = jnp.maximum(state @ params["w1"] + params["b1"], 0.0)
    return h @ params["w2"] + params["b2"]


if __name__ == "__main__":
    B, hidden_dim, hidden_dim_fourier = 8, 32, 64

    key = jax.random.PRNGKey(0)
    kp, ks = jax.random.split(key, 2)

    params = init_params(kp, hidden_dim, hidden_dim_fourier)
    state = jax.random.normal(ks, (B, hidden_dim), jnp.float32)

    out = fouriercoeffnet_forward(state, params)
    out = jax.block_until_ready(out)

    ref = reference_forward(state, params)
    assert out.shape == (B, 1), out.shape
    assert jnp.allclose(out, ref, atol=1e-4, rtol=1e-4), (out, ref)

    print("KERNEL_OK")
</pallas_src>

<mosaic_0001>
module attributes {stable_mosaic.version = 11 : i64} {
  func.func @_fourier_kernel(%arg0: i32, %arg1: memref<8x32xf32, #tpu.memory_space<vmem>>, %arg2: memref<32x64xf32, #tpu.memory_space<vmem>>, %arg3: memref<1x64xf32, #tpu.memory_space<vmem>>, %arg4: memref<64x1xf32, #tpu.memory_space<vmem>>, %arg5: memref<1x1xf32, #tpu.memory_space<vmem>>, %arg6: memref<8x1xf32, #tpu.memory_space<vmem>>) attributes {dimension_semantics = [#tpu.dimension_semantics<parallel>], iteration_bounds = array<i64: 1>, scalar_prefetch = 0 : i64, scratch_operands = 0 : i64, tpu.core_type = #tpu.core_type<tc>, window_params = [{transform_indices = @transform_0, window_bounds = array<i64: 8, 32>}, {pipeline_mode = #tpu.pipeline_mode<synchronous>, transform_indices = @transform_1, window_bounds = array<i64: 32, 64>}, {pipeline_mode = #tpu.pipeline_mode<synchronous>, transform_indices = @transform_2, window_bounds = array<i64: 1, 64>}, {pipeline_mode = #tpu.pipeline_mode<synchronous>, transform_indices = @transform_3, window_bounds = array<i64: 64, 1>}, {pipeline_mode = #tpu.pipeline_mode<synchronous>, transform_indices = @transform_4, window_bounds = array<i64: 1, 1>}, {transform_indices = @transform_5, window_bounds = array<i64: 8, 1>}]} {
    %c0 = arith.constant 0 : index
    %c0_0 = arith.constant 0 : index
    %0 = vector.load %arg1[%c0, %c0_0] : memref<8x32xf32, #tpu.memory_space<vmem>>, vector<8x32xf32>
    %c0_1 = arith.constant 0 : index
    %c0_2 = arith.constant 0 : index
    %1 = vector.load %arg2[%c0_1, %c0_2] : memref<32x64xf32, #tpu.memory_space<vmem>>, vector<32x64xf32>
    %cst = arith.constant dense<0.000000e+00> : vector<8x64xf32>
    %2 = tpu.matmul %0, %1, %cst {dimension_numbers = #tpu.dot_dimension_numbers<[1], [0], [0], [1], [0, 0, 1, 1], [], []>} : vector<8x32xf32>, vector<32x64xf32>, vector<8x64xf32> -> vector<8x64xf32>
    %c0_3 = arith.constant 0 : index
    %c0_4 = arith.constant 0 : index
    %3 = vector.load %arg3[%c0_3, %c0_4] : memref<1x64xf32, #tpu.memory_space<vmem>>, vector<1x64xf32>
    %4 = vector.broadcast %3 : vector<1x64xf32> to vector<8x64xf32>
    %5 = arith.addf %2, %4 : vector<8x64xf32>
    %cst_5 = arith.constant 0.000000e+00 : f32
    %6 = vector.broadcast %cst_5 : f32 to vector<8x64xf32>
    %7 = arith.maximumf %5, %6 : vector<8x64xf32>
    %c0_6 = arith.constant 0 : index
    %c0_7 = arith.constant 0 : index
    %8 = vector.load %arg4[%c0_6, %c0_7] : memref<64x1xf32, #tpu.memory_space<vmem>>, vector<64x1xf32>
    %cst_8 = arith.constant dense<0.000000e+00> : vector<8x1xf32>
    %9 = tpu.matmul %7, %8, %cst_8 {dimension_numbers = #tpu.dot_dimension_numbers<[1], [0], [0], [1], [0, 0, 1, 1], [], []>} : vector<8x64xf32>, vector<64x1xf32>, vector<8x1xf32> -> vector<8x1xf32>
    %c0_9 = arith.constant 0 : index
    %c0_10 = arith.constant 0 : index
    %10 = vector.load %arg5[%c0_9, %c0_10] : memref<1x1xf32, #tpu.memory_space<vmem>>, vector<1x1xf32>
    %11 = vector.broadcast %10 : vector<1x1xf32> to vector<8x1xf32>
    %12 = arith.addf %9, %11 : vector<8x1xf32>
    %c0_11 = arith.constant 0 : index
    %c0_12 = arith.constant 0 : index
    %13 = vector.load %arg6[%c0_11, %c0_12] : memref<8x1xf32, #tpu.memory_space<vmem>>, vector<8x1xf32>
    tpu.vector_store %arg6[%c0_11, %c0_12], %12 {strides = array<i32>} : memref<8x1xf32, #tpu.memory_space<vmem>>, vector<8x1xf32>,
    return
  }
  func.func @transform_0(%arg0: i32) -> (i32, i32) {
    %c0_i32 = arith.constant 0 : i32
    %c0_i32_0 = arith.constant 0 : i32
    return %arg0, %c0_i32 : i32, i32
  }
  func.func @transform_1(%arg0: i32) -> (i32, i32) {
    %c0_i32 = arith.constant 0 : i32
    %c0_i32_0 = arith.constant 0 : i32
    %c0_i32_1 = arith.constant 0 : i32
    return %c0_i32, %c0_i32_0 : i32, i32
  }
  func.func @transform_2(%arg0: i32) -> (i32, i32) {
    %c0_i32 = arith.constant 0 : i32
    %c0_i32_0 = arith.constant 0 : i32
    %c0_i32_1 = arith.constant 0 : i32
    return %c0_i32, %c0_i32_0 : i32, i32
  }
  func.func @transform_3(%arg0: i32) -> (i32, i32) {
    %c0_i32 = arith.constant 0 : i32
    %c0_i32_0 = arith.constant 0 : i32
    %c0_i32_1 = arith.constant 0 : i32
    return %c0_i32, %c0_i32_0 : i32, i32
  }
  func.func @transform_4(%arg0: i32) -> (i32, i32) {
    %c0_i32 = arith.constant 0 : i32
    %c0_i32_0 = arith.constant 0 : i32
    %c0_i32_1 = arith.constant 0 : i32
    return %c0_i32, %c0_i32_0 : i32, i32
  }
  func.func @transform_5(%arg0: i32) -> (i32, i32) {
    %c0_i32 = arith.constant 0 : i32
    %c0_i32_0 = arith.constant 0 : i32
    return %arg0, %c0_i32 : i32, i32
  }
}

</mosaic_0001>

<llo_original>
// kernel: tpu_custom_call.1
$region0: #{tpu_custom_call.1}
  #allocation0 [shape = 'u32[]', space=smem, size = 0x4, offset = 0x4, fixed_abs, tag = 'smem constant byte address 0x4 - core index']
  #allocation1 [shape = 'u32[144,128]{1,0:T(1,128)}', space=vmem, size = 0x12000, scoped, tag = 'internal scratch']
  #allocation2 [shape = 'f32[1,1]{1,0:T(1,128)S(1)}', space=vmem, size = 0x200, scoped, tag = 'scoped memory for tpu_custom_call.1']
  %s0 = inlined_call_operand.vmem [shape: f32[8,32], index: 0, kind: input, shape index: {}]
  %s1 = inlined_call_operand.vmem [shape: f32[32,64], index: 1, kind: input, shape index: {}]
  %s2 = inlined_call_operand.vmem [shape: f32[1,64], index: 2, kind: input, shape index: {}]
  %s3 = inlined_call_operand.vmem [shape: f32[64,1], index: 3, kind: input, shape index: {}]
  %s4 = inlined_call_operand.<no memory space> [shape: f32[1,1], index: 4, kind: input, shape index: {}]
  %s5 = inlined_call_operand.vmem [shape: f32[8,1], index: 5, kind: output, shape index: {}]
  %s6 = sld [smem:[#allocation0]]
  $region30: #{tpu_custom_call.1} parent=0
    _
  %s8 = ssub.s32 1, %s6
  %s9 = scalar_select 0, %s8, %s6
  %v10 = vstv %s4
  %11 = vst [vmem:[#allocation2] sm:$0x1] %v10
  // Predicated region
  $region2: #{tpu_custom_call.1} parent=0 // pred_check
    _
  $region3: #{tpu_custom_call.1} parent=0 // pred_check_branch
    %13 = sbr.rel (0) target = $region5
  $region4: #{tpu_custom_call.1} parent=0 // pred_region
    _
  $region5: #{tpu_custom_call.1} parent=0 // pred_fallthru
    _
  // Predicated region
  $region6: #{tpu_custom_call.1} parent=0 // pred_check
    _
  $region7: #{tpu_custom_call.1} parent=0 // pred_check_branch
    %15 = sbr.rel (0) target = $region9
  $region8: #{tpu_custom_call.1} parent=0 // pred_region
    _
  $region9: #{tpu_custom_call.1} parent=0 // pred_fallthru
    _
  // Predicated region
  $region10: #{tpu_custom_call.1} parent=0 // pred_check
    _
  $region11: #{tpu_custom_call.1} parent=0 // pred_check_branch
    %17 = sbr.rel (0) target = $region13
  $region12: #{tpu_custom_call.1} parent=0 // pred_region
    _
  $region13: #{tpu_custom_call.1} parent=0 // pred_fallthru
    _
  // Predicated region
  $region14: #{tpu_custom_call.1} parent=0 // pred_check
    _
  $region15: #{tpu_custom_call.1} parent=0 // pred_check_branch
    %19 = sbr.rel (0) target = $region17
  $region16: #{tpu_custom_call.1} parent=0 // pred_region
    _
  $region17: #{tpu_custom_call.1} parent=0 // pred_fallthru
    _
  // Predicated region
  $region18: #{tpu_custom_call.1} parent=0 // pred_check
    _
  $region19: #{tpu_custom_call.1} parent=0 // pred_check_branch
    %21 = sbr.rel (0) target = $region21
  $region20: #{tpu_custom_call.1} parent=0 // pred_region
    _
  $region21: #{tpu_custom_call.1} parent=0 // pred_fallthru
    _
  %v22 = vld [vmem:[%s0] sm:$0xff]
  %v23 = vld [vmem:[%s1] sm:$0xff]
  %v24 = vld [vmem:[%s1 + $0x8] sm:$0xff]
  %v25 = vld [vmem:[%s1 + $0x10] sm:$0xff]
  %v26 = vld [vmem:[%s1 + $0x18] sm:$0xff]
  %v27 = vld [vmem:[%s2] sm:$0x1]
  %v29 = vlaneseq
  %v30 = vshrl.u32 %v29, 7
  %v31 = vsub.s32 0, %v30
  %v32 = vrot.slane %v27, %v31
  %vm34 = vcmask 261120
  %v36 = vsel %vm34, %v22, 0
  %38 = vmatprep.subr.mxu0 0.0
  %39 = vmatpush1.msra.mxu0 0.0
  %40 = vmatprep.subr.mxu0 0.0
  %41 = vmatpush1.msra.mxu0 0.0
  %42 = vmatprep.subr.mxu0 0.0
  %43 = vmatpush1.msra.mxu0 0.0
  %44 = vmatprep.subr.mxu0 0.0
  %45 = vmatpush1.msra.mxu0 0.0
  %46 = vmatprep.subr.mxu0 0.0
  %47 = vmatpush1.msra.mxu0 0.0
  %48 = vmatprep.subr.mxu0 0.0
  %49 = vmatpush1.msra.mxu0 0.0
  %50 = vmatprep.subr.mxu0 0.0
  %51 = vmatpush1.msra.mxu0 0.0
  %52 = vmatprep.subr.mxu0 0.0
  %53 = vmatpush1.msra.mxu0 0.0
  %54 = vmatprep.subr.mxu0 0.0
  %55 = vmatpush1.msra.mxu0 0.0
  %56 = vmatprep.subr.mxu0 0.0
  %57 = vmatpush1.msra.mxu0 0.0
  %58 = vmatprep.subr.mxu0 0.0
  %59 = vmatpush1.msra.mxu0 0.0
  %60 = vmatprep.subr.mxu0 0.0
  %61 = vmatpush1.msra.mxu0 0.0
  %62 = vmatprep.subr.mxu0 0.0
  %63 = vmatpush1.msra.mxu0 %v26
  %64 = vmatprep.subr.mxu0 0.0
  %65 = vmatpush1.msra.mxu0 %v25
  %66 = vmatprep.subr.mxu0 0.0
  %67 = vmatpush1.msra.mxu0 %v24
  %68 = vmatprep.subr.mxu0 0.0
  %69 = vmatpush1.msra.mxu0 %v23
  %70 = vmatprep.subr.mxu0 0.0
  %71 = vmatpush2.msra.mxu0 0.0
  %72 = vmatprep.subr.mxu0 0.0
  %73 = vmatpush2.msra.mxu0 0.0
  %74 = vmatprep.subr.mxu0 0.0
  %75 = vmatpush2.msra.mxu0 0.0
  %76 = vmatprep.subr.mxu0 0.0
  %77 = vmatpush2.msra.mxu0 0.0
  %78 = vmatprep.subr.mxu0 0.0
  %79 = vmatpush2.msra.mxu0 0.0
  %80 = vmatprep.subr.mxu0 0.0
  %81 = vmatpush2.msra.mxu0 0.0
  %82 = vmatprep.subr.mxu0 0.0
  %83 = vmatpush2.msra.mxu0 0.0
  %84 = vmatprep.subr.mxu0 0.0
  %85 = vmatpush2.msra.mxu0 0.0
  %86 = vmatprep.subr.mxu0 0.0
  %87 = vmatpush2.msra.mxu0 0.0
  %88 = vmatprep.subr.mxu0 0.0
  %89 = vmatpush2.msra.mxu0 0.0
  %90 = vmatprep.subr.mxu0 0.0
  %91 = vmatpush2.msra.mxu0 0.0
  %92 = vmatprep.subr.mxu0 0.0
  %93 = vmatpush2.msra.mxu0 0.0
  %94 = vmatprep.subr.mxu0 0.0
  %95 = vmatpush2.msra.mxu0 0.0
  %96 = vmatprep.subr.mxu0 0.0
  %97 = vmatpush2.msra.mxu0 0.0
  %98 = vmatprep.subr.mxu0 0.0
  %99 = vmatpush2.msra.mxu0 0.0
  %100 = vmatprep.subr.mxu0 0.0
  %101 = vmatpush2.msra.mxu0 0.0
  %102 = vmatprep.mubr.f32.mxu0 0.0
  %103 = vmatmul.mubr.f32.gmra.mxu0 %v36
  %v104 = vpop.f32.mrf.mxu0
  %v105 = vadd.f32 %v32, %v104
  %v106 = vpop.f32.mrf.mxu0
  %107 = vdwg.mxu0
  %v108 = vmax.f32 %v105, 0.0
  %v109 = vld [vmem:[%s3] sm:$0xff]
  %v110 = vld [vmem:[%s3 + $0x8] sm:$0xff]
  %v111 = vld [vmem:[%s3 + $0x10] sm:$0xff]
  %v112 = vld [vmem:[%s3 + $0x18] sm:$0xff]
  %v113 = vld [vmem:[%s3 + $0x20] sm:$0xff]
  %v114 = vld [vmem:[%s3 + $0x28] sm:$0xff]
  %v115 = vld [vmem:[%s3 + $0x30] sm:$0xff]
  %v116 = vld [vmem:[%s3 + $0x38] sm:$0xff]
  %v117 = vld [vmem:[#allocation2] sm:$0x1]
  %v119 = vlaneseq
  %v120 = vshrl.u32 %v119, 7
  %v121 = vsub.s32 0, %v120
  %v122 = vrot.slane %v117, %v121
  %vm124 = vcmask 523264
  %v126 = vsel %vm124, %v108, 0
  %128 = vmatprep.subr.mxu0 0.0
  %129 = vmatpush1.msra.mxu0 0.0
  %130 = vmatprep.subr.mxu0 0.0
  %131 = vmatpush1.msra.mxu0 0.0
  %132 = vmatprep.subr.mxu0 0.0
  %133 = vmatpush1.msra.mxu0 0.0
  %134 = vmatprep.subr.mxu0 0.0
  %135 = vmatpush1.msra.mxu0 0.0
  %136 = vmatprep.subr.mxu0 0.0
  %137 = vmatpush1.msra.mxu0 0.0
  %138 = vmatprep.subr.mxu0 0.0
  %139 = vmatpush1.msra.mxu0 0.0
  %140 = vmatprep.subr.mxu0 0.0
  %141 = vmatpush1.msra.mxu0 0.0
  %142 = vmatprep.subr.mxu0 0.0
  %143 = vmatpush1.msra.mxu0 0.0
  %144 = vmatprep.subr.mxu0 0.0
  %145 = vmatpush1.msra.mxu0 %v116
  %146 = vmatprep.subr.mxu0 0.0
  %147 = vmatpush1.msra.mxu0 %v115
  %148 = vmatprep.subr.mxu0 0.0
  %149 = vmatpush1.msra.mxu0 %v114
  %150 = vmatprep.subr.mxu0 0.0
  %151 = vmatpush1.msra.mxu0 %v113
  %152 = vmatprep.subr.mxu0 0.0
  %153 = vmatpush1.msra.mxu0 %v112
  %154 = vmatprep.subr.mxu0 0.0
  %155 = vmatpush1.msra.mxu0 %v111
  %156 = vmatprep.subr.mxu0 0.0
  %157 = vmatpush1.msra.mxu0 %v110
  %158 = vmatprep.subr.mxu0 0.0
  %159 = vmatpush1.msra.mxu0 %v109
  %160 = vmatprep.subr.mxu0 0.0
  %161 = vmatpush2.msra.mxu0 0.0
  %162 = vmatprep.subr.mxu0 0.0
  %163 = vmatpush2.msra.mxu0 0.0
  %164 = vmatprep.subr.mxu0 0.0
  %165 = vmatpush2.msra.mxu0 0.0
  %166 = vmatprep.subr.mxu0 0.0
  %167 = vmatpush2.msra.mxu0 0.0
  %168 = vmatprep.subr.mxu0 0.0
  %169 = vmatpush2.msra.mxu0 0.0
  %170 = vmatprep.subr.mxu0 0.0
  %171 = vmatpush2.msra.mxu0 0.0
  %172 = vmatprep.subr.mxu0 0.0
  %173 = vmatpush2.msra.mxu0 0.0
  %174 = vmatprep.subr.mxu0 0.0
  %175 = vmatpush2.msra.mxu0 0.0
  %176 = vmatprep.subr.mxu0 0.0
  %177 = vmatpush2.msra.mxu0 0.0
  %178 = vmatprep.subr.mxu0 0.0
  %179 = vmatpush2.msra.mxu0 0.0
  %180 = vmatprep.subr.mxu0 0.0
  %181 = vmatpush2.msra.mxu0 0.0
  %182 = vmatprep.subr.mxu0 0.0
  %183 = vmatpush2.msra.mxu0 0.0
  %184 = vmatprep.subr.mxu0 0.0
  %185 = vmatpush2.msra.mxu0 0.0
  %186 = vmatprep.subr.mxu0 0.0
  %187 = vmatpush2.msra.mxu0 0.0
  %188 = vmatprep.subr.mxu0 0.0
  %189 = vmatpush2.msra.mxu0 0.0
  %190 = vmatprep.subr.mxu0 0.0
  %191 = vmatpush2.msra.mxu0 0.0
  %192 = vmatprep.mubr.f32.mxu0 0.0
  %193 = vmatmul.mubr.f32.gmra.mxu0 %v126
  %v194 = vpop.f32.mrf.mxu0
  %v195 = vadd.f32 %v122, %v194
  %v196 = vpop.f32.mrf.mxu0
  %197 = vdwg.mxu0
  %vm198 = vcmask 7168
  %199 = vst.msk [vmem:[%s5] sm:$0xff] %vm198, %v195
  // Predicated region
  $region22: #{tpu_custom_call.1} parent=0 // pred_check
    _
  $region23: #{tpu_custom_call.1} parent=0 // pred_check_branch
    %201 = sbr.rel (0) target = $region25
  $region24: #{tpu_custom_call.1} parent=0 // pred_region
    _
  $region25: #{tpu_custom_call.1} parent=0 // pred_fallthru
    _
  // Predicated region
  $region26: #{tpu_custom_call.1} parent=0 // pred_check
    _
  $region27: #{tpu_custom_call.1} parent=0 // pred_check_branch
    %203 = sbr.rel (0) target = $region29
  $region28: #{tpu_custom_call.1} parent=0 // pred_region
    _
  $region29: #{tpu_custom_call.1} parent=0 // pred_fallthru
    _

</llo_original>
